<compile_context>
chip_gen: v7x
topology: tpu7x:2x2x1
jax: 0.10.0
libtpu: 0.0.40
codegen_flags: <defaults>
</compile_context>

<pallas_src>
import functools

import jax
import jax.numpy as jnp
from jax import lax
from jax.experimental import pallas as pl
from jax.experimental.pallas import tpu as pltpu


# --------------------------------------------------------------------------- #
# Block-size selection: biggest time-block that fits a conservative VMEM budget
# (padded-tile aware: the lane dim of x (I) and of the proj scratch are padded
# to 128, sublanes to 8).  Budget is well under the smallest default scoped
# VMEM limit (16 MiB on v5e) and v7x's 32 MiB scoped / 64 MiB physical.
# --------------------------------------------------------------------------- #
def _pick_block_t(T, B, I, H, *, fast_path,
                  vmem_budget_bytes=12 * 1024 * 1024, cap=2048):
    lane_pad = lambda n: -(-n // 128) * 128
    x_bytes = 2 * B * lane_pad(I) * 4                 # double-buffered x, per step
    if fast_path:
        proj_bytes = lane_pad(B) * 4                  # (block_t, B) scratch row
    else:
        proj_bytes = lane_pad(B * H) * 4              # (block_t, B*H) scratch row
    bt = min(cap, vmem_budget_bytes // (x_bytes + proj_bytes))
    bt = max(8, bt - bt % 8)
    return T if bt >= T else bt                       # full-dim block if it all fits


# --------------------------------------------------------------------------- #
# Fast path: hidden_size == 1, output_size == 1 (the shipped module).
# --------------------------------------------------------------------------- #
def _rnn_kernel_h1(x_ref, p_ref, out_ref, h_ref, proj_ref, *,
                   block_t, batch, in_features, seq_len, ragged, unroll):
    """x_ref   : (B, block_t, I) VMEM  streamed time block, native layout
       p_ref   : (I + 4,)        SMEM  [w_ih[0..I-1], w_hh, b_ih+b_hh, w_fc, b_fc]
       out_ref : (1, B)          VMEM  sigmoid(fc(h_T)); written on last grid step
       h_ref   : (1, B)          VMEM scratch  hidden state carried across steps
       proj_ref: (block_t, B)    VMEM scratch  hoisted per-block input projection
    """
    tb = pl.program_id(0)

    @pl.when(tb == 0)
    def _init():
        h_ref[...] = jnp.zeros_like(h_ref)

    # Hoisted input projection (pure VPU, off the serial tanh chain):
    #   proj[t, b] = (b_ih + b_hh) + sum_i x[b, t, i] * w_ih[i]
    # One lane-column store per batch element -> (block_t, B) with time in
    # sublanes, so each recurrence step reads a single sublane row.
    bias = p_ref[in_features + 1]
    for bi in range(batch):
        xb = x_ref[bi]                                     # (block_t, I)
        sb = xb[:, 0:1] * p_ref[0] + bias                  # (block_t, 1)
        for i in range(1, in_features):
            sb = sb + xb[:, i:i + 1] * p_ref[i]
        proj_ref[:, bi:bi + 1] = sb

    w_hh = p_ref[in_features]                              # scalar (H == 1)

    def step(t, h):                                        # h: (1, B)
        p_t = proj_ref[pl.ds(t, 1), :]                     # (1, B) sublane-row load
        h_new = jnp.tanh(p_t + h * w_hh)                   # vadd + vmul + EUP tanh
        if ragged:                                         # mask padded tail steps
            h_new = jnp.where(tb * block_t + t < seq_len, h_new, h)
        return h_new

    h = lax.fori_loop(0, block_t, step, h_ref[...], unroll=unroll)
    h_ref[...] = h

    @pl.when(tb == pl.num_programs(0) - 1)
    def _finalize():
        # H == 1, O == 1: fc is a scalar FMA; exact sigmoid once at the end.
        logits = h * p_ref[in_features + 2] + p_ref[in_features + 3]   # (1, B)
        out_ref[...] = 1.0 / (1.0 + jnp.exp(-logits))


# --------------------------------------------------------------------------- #
# Generic fallback: hidden_size > 1 or output_size > 1 (small B*H).
# The recurrence is flattened over (batch, hidden): h_flat has shape (1, B*H)
# and the weights are block-diagonal, so every op is a plain 2-D matmul or a
# sublane-row load -- the same op families as the fast path.
# --------------------------------------------------------------------------- #
def _rnn_kernel_general(x_ref, w_ih_ref, w_hh_ref, b_ref, w_fc_ref, b_fc_ref,
                        out_ref, h_ref, proj_ref, *,
                        block_t, batch, hidden, seq_len, ragged, unroll):
    tb = pl.program_id(0)

    @pl.when(tb == 0)
    def _init():
        h_ref[...] = jnp.zeros_like(h_ref)

    # Hoisted input projection: one MXU matmul per batch row, off the serial chain.
    for bi in range(batch):
        proj_ref[:, bi * hidden:(bi + 1) * hidden] = (
            jnp.dot(x_ref[bi], w_ih_ref[...],
                    preferred_element_type=jnp.float32,
                    precision=lax.Precision.HIGHEST)
            + b_ref[...])                                  # (block_t, H)

    w_hh = w_hh_ref[...]                                   # (B*H, B*H) block-diag

    def step(t, h):                                        # h: (1, B*H)
        p_t = proj_ref[pl.ds(t, 1), :]                     # (1, B*H) sublane row
        h_new = jnp.tanh(p_t + jnp.dot(h, w_hh,
                                       preferred_element_type=jnp.float32,
                                       precision=lax.Precision.HIGHEST))
        if ragged:
            h_new = jnp.where(tb * block_t + t < seq_len, h_new, h)
        return h_new

    h = lax.fori_loop(0, block_t, step, h_ref[...], unroll=unroll)
    h_ref[...] = h

    @pl.when(tb == pl.num_programs(0) - 1)
    def _finalize():
        logits = (jnp.dot(h, w_fc_ref[...], preferred_element_type=jnp.float32,
                          precision=lax.Precision.HIGHEST)
                  + b_fc_ref[...])                         # (1, B*O)
        out_ref[...] = 1.0 / (1.0 + jnp.exp(-logits))


# --------------------------------------------------------------------------- #
# Wrapper
# --------------------------------------------------------------------------- #
def rnn_forward(x, w_ih, w_hh, b_ih, b_hh, w_fc, b_fc, *, block_t=None):
    """Forward pass matching the PyTorch module.  x: (B, T, I), batch_first."""
    B, T, I = x.shape
    H, O = w_hh.shape[0], w_fc.shape[0]
    x = x.astype(jnp.float32)
    fast = (H == 1 and O == 1)

    if block_t is None:
        block_t = _pick_block_t(T, B, I, H, fast_path=fast)
    block_t = min(int(block_t), T)
    if block_t < T:                                    # (8,128)-tileable when not full-dim
        block_t = max(8, block_t - block_t % 8)
    num_blocks = -(-T // block_t)
    ragged = (T % block_t) != 0

    # NOTE: a leading "parallel" batch axis (to shard across v7x's 2 TensorCores)
    # would slot in here for large B; at B=2 it only adds per-step grid overhead.
    cparams = pltpu.CompilerParams(dimension_semantics=("arbitrary",))

    if fast:
        # All scalar-sized parameters in ONE small SMEM array (no padded VMEM
        # tiles, no per-parameter DMA).  Layout: [w_ih[0..I-1], w_hh, b, w_fc, b_fc].
        params = jnp.concatenate([
            w_ih.reshape(-1), w_hh.reshape(-1), (b_ih + b_hh).reshape(-1),
            w_fc.reshape(-1), b_fc.reshape(-1)]).astype(jnp.float32)

        kernel = functools.partial(
            _rnn_kernel_h1, block_t=block_t, batch=B, in_features=I,
            seq_len=T, ragged=ragged, unroll=8)

        grid_spec = pltpu.PrefetchScalarGridSpec(
            num_scalar_prefetch=0,
            grid=(num_blocks,),
            in_specs=[
                pl.BlockSpec((B, block_t, I), lambda tb: (0, tb, 0)),
                pl.BlockSpec(memory_space=pltpu.MemorySpace.SMEM),
            ],
            out_specs=pl.BlockSpec((1, B), lambda tb: (0, 0)),
            scratch_shapes=[
                pltpu.VMEM((1, B), jnp.float32),          # carried hidden state
                pltpu.VMEM((block_t, B), jnp.float32),    # hoisted projection
            ],
        )
        out = pl.pallas_call(
            kernel,
            out_shape=jax.ShapeDtypeStruct((1, B), jnp.float32),
            grid_spec=grid_spec,
            compiler_params=cparams,
        )(x, params)
        return out.reshape(B, O)                           # free row-major reshape

    # ---- generic fallback (hidden_size > 1 or output_size > 1) ----
    eye_b = jnp.eye(B, dtype=jnp.float32)
    w_ih_t = w_ih.T.astype(jnp.float32)                    # (I, H)
    w_hh_blk = jnp.kron(eye_b, w_hh.T.astype(jnp.float32))  # (B*H, B*H)
    b = (b_ih + b_hh).reshape(1, H).astype(jnp.float32)     # (1, H)
    w_fc_blk = jnp.kron(eye_b, w_fc.T.astype(jnp.float32))  # (B*H, B*O)
    b_fc_tile = jnp.tile(b_fc.reshape(1, O).astype(jnp.float32), (1, B))  # (1, B*O)

    kernel = functools.partial(
        _rnn_kernel_general, block_t=block_t, batch=B, hidden=H,
        seq_len=T, ragged=ragged, unroll=8)

    grid_spec = pltpu.PrefetchScalarGridSpec(
        num_scalar_prefetch=0,
        grid=(num_blocks,),
        in_specs=[
            pl.BlockSpec((B, block_t, I), lambda tb: (0, tb, 0)),
            pl.BlockSpec((I, H), lambda tb: (0, 0)),
            pl.BlockSpec((B * H, B * H), lambda tb: (0, 0)),
            pl.BlockSpec((1, H), lambda tb: (0, 0)),
            pl.BlockSpec((B * H, B * O), lambda tb: (0, 0)),
            pl.BlockSpec((1, B * O), lambda tb: (0, 0)),
        ],
        out_specs=pl.BlockSpec((1, B * O), lambda tb: (0, 0)),
        scratch_shapes=[
            pltpu.VMEM((1, B * H), jnp.float32),           # carried hidden state
            pltpu.VMEM((block_t, B * H), jnp.float32),     # hoisted projection
        ],
    )
    out = pl.pallas_call(
        kernel,
        out_shape=jax.ShapeDtypeStruct((1, B * O), jnp.float32),
        grid_spec=grid_spec,
        compiler_params=cparams,
    )(x, w_ih_t, w_hh_blk, b, w_fc_blk, b_fc_tile)
    return out.reshape(B, O)                               # free row-major reshape


# --------------------------------------------------------------------------- #
# Pure-JAX reference (exact f32 elementwise math, scan over time).
# --------------------------------------------------------------------------- #
def ref_forward(x, w_ih, w_hh, b_ih, b_hh, w_fc, b_fc):
    B = x.shape[0]
    H = w_hh.shape[0]
    xs = jnp.transpose(x, (1, 0, 2)).astype(jnp.float32)   # (T, B, I)

    def step(h, xt):
        pre = ((xt[:, None, :] * w_ih[None, :, :]).sum(-1) + b_ih
               + (h[:, None, :] * w_hh[None, :, :]).sum(-1) + b_hh)
        return jnp.tanh(pre), None

    h, _ = lax.scan(step, jnp.zeros((B, H), jnp.float32), xs)
    logits = (h[:, None, :] * w_fc[None, :, :]).sum(-1) + b_fc
    return jax.nn.sigmoid(logits)


if __name__ == "__main__":
    # Module hyperparameters (from the PyTorch script).
    input_size, hidden_size, output_size = 3, 1, 1
    B, T = 2, 8

    key = jax.random.PRNGKey(0)
    kx, k1, k2, k3, k4, k5, k6, kx2 = jax.random.split(key, 8)

    # Input mimics MinMaxScaler output: values in [0, 1].
    x = jax.random.uniform(kx, (B, T, input_size), dtype=jnp.float32)

    # PyTorch-style U(-1/sqrt(H), 1/sqrt(H)) parameter init.
    s = 1.0 / jnp.sqrt(jnp.float32(hidden_size))
    w_ih = jax.random.uniform(k1, (hidden_size, input_size), minval=-s, maxval=s)
    w_hh = jax.random.uniform(k2, (hidden_size, hidden_size), minval=-s, maxval=s)
    b_ih = jax.random.uniform(k3, (hidden_size,), minval=-s, maxval=s)
    b_hh = jax.random.uniform(k4, (hidden_size,), minval=-s, maxval=s)
    w_fc = jax.random.uniform(k5, (output_size, hidden_size), minval=-s, maxval=s)
    b_fc = jax.random.uniform(k6, (output_size,), minval=-s, maxval=s)

    # --- Test 1: the module's shipped shapes (single time-block). ---
    out = jax.block_until_ready(rnn_forward(x, w_ih, w_hh, b_ih, b_hh, w_fc, b_fc))
    exp = ref_forward(x, w_ih, w_hh, b_ih, b_hh, w_fc, b_fc)
    assert out.shape == (B, output_size)
    assert jnp.allclose(out, exp, atol=1e-5, rtol=1e-5)

    # --- Test 2: long sequence, budget-driven single block (block_t == T). ---
    T2 = 1000
    x2 = jax.random.uniform(kx2, (B, T2, input_size), dtype=jnp.float32)
    out2 = jax.block_until_ready(rnn_forward(x2, w_ih, w_hh, b_ih, b_hh, w_fc, b_fc))
    exp2 = ref_forward(x2, w_ih, w_hh, b_ih, b_hh, w_fc, b_fc)
    assert jnp.allclose(out2, exp2, atol=1e-5, rtol=1e-5)

    # --- Test 3: multi-block streaming with a ragged tail (1000 = 7*128 + 104). ---
    out3 = jax.block_until_ready(
        rnn_forward(x2, w_ih, w_hh, b_ih, b_hh, w_fc, b_fc, block_t=128))
    assert jnp.allclose(out3, exp2, atol=1e-5, rtol=1e-5)

    # --- Test 4: generic fallback path (hidden_size > 1, output_size > 1). ---
    H2, O2, T4 = 4, 2, 24
    kk = jax.random.split(jax.random.PRNGKey(1), 8)
    s2 = 1.0 / jnp.sqrt(jnp.float32(H2))
    x4 = jax.random.uniform(kk[0], (B, T4, input_size), dtype=jnp.float32)
    w_ih4 = jax.random.uniform(kk[1], (H2, input_size), minval=-s2, maxval=s2)
    w_hh4 = jax.random.uniform(kk[2], (H2, H2), minval=-s2, maxval=s2)
    b_ih4 = jax.random.uniform(kk[3], (H2,), minval=-s2, maxval=s2)
    b_hh4 = jax.random.uniform(kk[4], (H2,), minval=-s2, maxval=s2)
    w_fc4 = jax.random.uniform(kk[5], (O2, H2), minval=-s2, maxval=s2)
    b_fc4 = jax.random.uniform(kk[6], (O2,), minval=-s2, maxval=s2)
    out4 = jax.block_until_ready(
        rnn_forward(x4, w_ih4, w_hh4, b_ih4, b_hh4, w_fc4, b_fc4))
    exp4 = ref_forward(x4, w_ih4, w_hh4, b_ih4, b_hh4, w_fc4, b_fc4)
    assert out4.shape == (B, O2)
    assert jnp.allclose(out4, exp4, atol=1e-4, rtol=1e-4)

    print("KERNEL_OK")
</pallas_src>

<mosaic_0001>
module attributes {stable_mosaic.version = 11 : i64} {
  func.func @_rnn_kernel_h1(%arg0: i32, %arg1: memref<2x8x3xf32, #tpu.memory_space<vmem>>, %arg2: memref<7xf32, #tpu.memory_space<smem>>, %arg3: memref<1x2xf32, #tpu.memory_space<vmem>>, %arg4: memref<1x2xf32, #tpu.memory_space<vmem>>, %arg5: memref<8x2xf32, #tpu.memory_space<vmem>>) attributes {dimension_semantics = [#tpu.dimension_semantics<arbitrary>], iteration_bounds = array<i64: 1>, scalar_prefetch = 0 : i64, scratch_operands = 2 : i64, tpu.core_type = #tpu.core_type<tc>, window_params = [{transform_indices = @transform_0, window_bounds = array<i64: 2, 8, 3>}, {transform_indices = @transform_1, window_bounds = array<i64: 7>}, {pipeline_mode = #tpu.pipeline_mode<synchronous>, transform_indices = @transform_2, window_bounds = array<i64: 1, 2>}]} {
    %c0_i32 = arith.constant 0 : i32
    %0 = arith.cmpi eq, %arg0, %c0_i32 : i32
    %1 = arith.extui %0 : i1 to i32
    %c0_i32_0 = arith.constant 0 : i32
    %2 = arith.cmpi ne, %1, %c0_i32_0 : i32
    scf.if %2 {
      %cst = arith.constant 0.000000e+00 : f32
      %96 = vector.broadcast %cst : f32 to vector<1x2xf32>
      %c0_29 = arith.constant 0 : index
      %c0_30 = arith.constant 0 : index
      %97 = vector.load %arg4[%c0_29, %c0_30] : memref<1x2xf32, #tpu.memory_space<vmem>>, vector<1x2xf32>
      tpu.vector_store %arg4[%c0_29, %c0_30], %96 {strides = array<i32>} : memref<1x2xf32, #tpu.memory_space<vmem>>, vector<1x2xf32>,
    } else {
    }
    %c4 = arith.constant 4 : index
    %3 = memref.load %arg2[%c4] : memref<7xf32, #tpu.memory_space<smem>>
    %c0 = arith.constant 0 : index
    %c0_1 = arith.constant 0 : index
    %c0_2 = arith.constant 0 : index
    %4 = vector.load %arg1[%c0, %c0_1, %c0_2] : memref<2x8x3xf32, #tpu.memory_space<vmem>>, vector<1x8x3xf32>
    %5 = vector.shape_cast %4 : vector<1x8x3xf32> to vector<8x3xf32>
    %6 = vector.extract_strided_slice %5 {offsets = [0, 0], sizes = [8, 1], strides = [1, 1]} : vector<8x3xf32> to vector<8x1xf32>
    %c0_3 = arith.constant 0 : index
    %7 = memref.load %arg2[%c0_3] : memref<7xf32, #tpu.memory_space<smem>>
    %8 = vector.broadcast %7 : f32 to vector<8x1xf32>
    %9 = arith.mulf %6, %8 : vector<8x1xf32>
    %10 = vector.broadcast %3 : f32 to vector<8x1xf32>
    %11 = arith.addf %9, %10 : vector<8x1xf32>
    %12 = vector.extract_strided_slice %5 {offsets = [0, 1], sizes = [8, 1], strides = [1, 1]} : vector<8x3xf32> to vector<8x1xf32>
    %c1 = arith.constant 1 : index
    %13 = memref.load %arg2[%c1] : memref<7xf32, #tpu.memory_space<smem>>
    %14 = vector.broadcast %13 : f32 to vector<8x1xf32>
    %15 = arith.mulf %12, %14 : vector<8x1xf32>
    %16 = arith.addf %11, %15 : vector<8x1xf32>
    %17 = vector.extract_strided_slice %5 {offsets = [0, 2], sizes = [8, 1], strides = [1, 1]} : vector<8x3xf32> to vector<8x1xf32>
    %c2 = arith.constant 2 : index
    %18 = memref.load %arg2[%c2] : memref<7xf32, #tpu.memory_space<smem>>
    %19 = vector.broadcast %18 : f32 to vector<8x1xf32>
    %20 = arith.mulf %17, %19 : vector<8x1xf32>
    %21 = arith.addf %16, %20 : vector<8x1xf32>
    %c0_4 = arith.constant 0 : index
    %c0_5 = arith.constant 0 : index
    %22 = vector.load %arg5[%c0_4, %c0_5] : memref<8x2xf32, #tpu.memory_space<vmem>>, vector<8x1xf32>
    tpu.vector_store %arg5[%c0_4, %c0_5], %21 {strides = array<i32>} : memref<8x2xf32, #tpu.memory_space<vmem>>, vector<8x1xf32>,
    %c1_6 = arith.constant 1 : index
    %c0_7 = arith.constant 0 : index
    %c0_8 = arith.constant 0 : index
    %23 = vector.load %arg1[%c1_6, %c0_7, %c0_8] : memref<2x8x3xf32, #tpu.memory_space<vmem>>, vector<1x8x3xf32>
    %24 = vector.shape_cast %23 : vector<1x8x3xf32> to vector<8x3xf32>
    %25 = vector.extract_strided_slice %24 {offsets = [0, 0], sizes = [8, 1], strides = [1, 1]} : vector<8x3xf32> to vector<8x1xf32>
    %c0_9 = arith.constant 0 : index
    %26 = memref.load %arg2[%c0_9] : memref<7xf32, #tpu.memory_space<smem>>
    %27 = vector.broadcast %26 : f32 to vector<8x1xf32>
    %28 = arith.mulf %25, %27 : vector<8x1xf32>
    %29 = vector.broadcast %3 : f32 to vector<8x1xf32>
    %30 = arith.addf %28, %29 : vector<8x1xf32>
    %31 = vector.extract_strided_slice %24 {offsets = [0, 1], sizes = [8, 1], strides = [1, 1]} : vector<8x3xf32> to vector<8x1xf32>
    %c1_10 = arith.constant 1 : index
    %32 = memref.load %arg2[%c1_10] : memref<7xf32, #tpu.memory_space<smem>>
    %33 = vector.broadcast %32 : f32 to vector<8x1xf32>
    %34 = arith.mulf %31, %33 : vector<8x1xf32>
    %35 = arith.addf %30, %34 : vector<8x1xf32>
    %36 = vector.extract_strided_slice %24 {offsets = [0, 2], sizes = [8, 1], strides = [1, 1]} : vector<8x3xf32> to vector<8x1xf32>
    %c2_11 = arith.constant 2 : index
    %37 = memref.load %arg2[%c2_11] : memref<7xf32, #tpu.memory_space<smem>>
    %38 = vector.broadcast %37 : f32 to vector<8x1xf32>
    %39 = arith.mulf %36, %38 : vector<8x1xf32>
    %40 = arith.addf %35, %39 : vector<8x1xf32>
    %c0_12 = arith.constant 0 : index
    %c1_13 = arith.constant 1 : index
    %41 = vector.load %arg5[%c0_12, %c1_13] : memref<8x2xf32, #tpu.memory_space<vmem>>, vector<8x1xf32>
    tpu.vector_store %arg5[%c0_12, %c1_13], %40 {strides = array<i32>} : memref<8x2xf32, #tpu.memory_space<vmem>>, vector<8x1xf32>,
    %c3 = arith.constant 3 : index
    %42 = memref.load %arg2[%c3] : memref<7xf32, #tpu.memory_space<smem>>
    %c0_14 = arith.constant 0 : index
    %c0_15 = arith.constant 0 : index
    %43 = vector.load %arg4[%c0_14, %c0_15] : memref<1x2xf32, #tpu.memory_space<vmem>>, vector<1x2xf32>
    %c0_i32_16 = arith.constant 0 : i32
    %44 = arith.index_cast %c0_i32_16 : i32 to index
    %c0_17 = arith.constant 0 : index
    %45 = vector.load %arg5[%44, %c0_17] : memref<8x2xf32, #tpu.memory_space<vmem>>, vector<1x2xf32>
    %46 = vector.broadcast %42 : f32 to vector<1x2xf32>
    %47 = arith.mulf %43, %46 : vector<1x2xf32>
    %48 = arith.addf %45, %47 : vector<1x2xf32>
    %49 = math.tanh %48 : vector<1x2xf32>
    %c1_i32 = arith.constant 1 : i32
    %50 = arith.index_cast %c1_i32 : i32 to index
    %c0_18 = arith.constant 0 : index
    %51 = vector.load %arg5[%50, %c0_18] : memref<8x2xf32, #tpu.memory_space<vmem>>, vector<1x2xf32>
    %52 = vector.broadcast %42 : f32 to vector<1x2xf32>
    %53 = arith.mulf %49, %52 : vector<1x2xf32>
    %54 = arith.addf %51, %53 : vector<1x2xf32>
    %55 = math.tanh %54 : vector<1x2xf32>
    %c2_i32 = arith.constant 2 : i32
    %56 = arith.index_cast %c2_i32 : i32 to index
    %c0_19 = arith.constant 0 : index
    %57 = vector.load %arg5[%56, %c0_19] : memref<8x2xf32, #tpu.memory_space<vmem>>, vector<1x2xf32>
    %58 = vector.broadcast %42 : f32 to vector<1x2xf32>
    %59 = arith.mulf %55, %58 : vector<1x2xf32>
    %60 = arith.addf %57, %59 : vector<1x2xf32>
    %61 = math.tanh %60 : vector<1x2xf32>
    %c3_i32 = arith.constant 3 : i32
    %62 = arith.index_cast %c3_i32 : i32 to index
    %c0_20 = arith.constant 0 : index
    %63 = vector.load %arg5[%62, %c0_20] : memref<8x2xf32, #tpu.memory_space<vmem>>, vector<1x2xf32>
    %64 = vector.broadcast %42 : f32 to vector<1x2xf32>
    %65 = arith.mulf %61, %64 : vector<1x2xf32>
    %66 = arith.addf %63, %65 : vector<1x2xf32>
    %67 = math.tanh %66 : vector<1x2xf32>
    %c4_i32 = arith.constant 4 : i32
    %68 = arith.index_cast %c4_i32 : i32 to index
    %c0_21 = arith.constant 0 : index
    %69 = vector.load %arg5[%68, %c0_21] : memref<8x2xf32, #tpu.memory_space<vmem>>, vector<1x2xf32>
    %70 = vector.broadcast %42 : f32 to vector<1x2xf32>
    %71 = arith.mulf %67, %70 : vector<1x2xf32>
    %72 = arith.addf %69, %71 : vector<1x2xf32>
    %73 = math.tanh %72 : vector<1x2xf32>
    %c5_i32 = arith.constant 5 : i32
    %74 = arith.index_cast %c5_i32 : i32 to index
    %c0_22 = arith.constant 0 : index
    %75 = vector.load %arg5[%74, %c0_22] : memref<8x2xf32, #tpu.memory_space<vmem>>, vector<1x2xf32>
    %76 = vector.broadcast %42 : f32 to vector<1x2xf32>
    %77 = arith.mulf %73, %76 : vector<1x2xf32>
    %78 = arith.addf %75, %77 : vector<1x2xf32>
    %79 = math.tanh %78 : vector<1x2xf32>
    %c6_i32 = arith.constant 6 : i32
    %80 = arith.index_cast %c6_i32 : i32 to index
    %c0_23 = arith.constant 0 : index
    %81 = vector.load %arg5[%80, %c0_23] : memref<8x2xf32, #tpu.memory_space<vmem>>, vector<1x2xf32>
    %82 = vector.broadcast %42 : f32 to vector<1x2xf32>
    %83 = arith.mulf %79, %82 : vector<1x2xf32>
    %84 = arith.addf %81, %83 : vector<1x2xf32>
    %85 = math.tanh %84 : vector<1x2xf32>
    %c7_i32 = arith.constant 7 : i32
    %86 = arith.index_cast %c7_i32 : i32 to index
    %c0_24 = arith.constant 0 : index
    %87 = vector.load %arg5[%86, %c0_24] : memref<8x2xf32, #tpu.memory_space<vmem>>, vector<1x2xf32>
    %88 = vector.broadcast %42 : f32 to vector<1x2xf32>
    %89 = arith.mulf %85, %88 : vector<1x2xf32>
    %90 = arith.addf %87, %89 : vector<1x2xf32>
    %91 = math.tanh %90 : vector<1x2xf32>
    %c8_i32 = arith.constant 8 : i32
    %c0_25 = arith.constant 0 : index
    %c0_26 = arith.constant 0 : index
    %92 = vector.load %arg4[%c0_25, %c0_26] : memref<1x2xf32, #tpu.memory_space<vmem>>, vector<1x2xf32>
    tpu.vector_store %arg4[%c0_25, %c0_26], %91 {strides = array<i32>} : memref<1x2xf32, #tpu.memory_space<vmem>>, vector<1x2xf32>,
    %c0_i32_27 = arith.constant 0 : i32
    %93 = arith.cmpi eq, %arg0, %c0_i32_27 : i32
    %94 = arith.extui %93 : i1 to i32
    %c0_i32_28 = arith.constant 0 : i32
    %95 = arith.cmpi ne, %94, %c0_i32_28 : i32
    scf.if %95 {
      %c5 = arith.constant 5 : index
      %96 = memref.load %arg2[%c5] : memref<7xf32, #tpu.memory_space<smem>>
      %97 = vector.broadcast %96 : f32 to vector<1x2xf32>
      %98 = arith.mulf %91, %97 : vector<1x2xf32>
      %c6 = arith.constant 6 : index
      %99 = memref.load %arg2[%c6] : memref<7xf32, #tpu.memory_space<smem>>
      %100 = vector.broadcast %99 : f32 to vector<1x2xf32>
      %101 = arith.addf %98, %100 : vector<1x2xf32>
      %cst = arith.constant 0.000000e+00 : f32
      %102 = vector.broadcast %cst : f32 to vector<1x2xf32>
      %103 = arith.subf %102, %101 : vector<1x2xf32>
      %104 = math.exp %103 : vector<1x2xf32>
      %cst_29 = arith.constant 1.000000e+00 : f32
      %105 = vector.broadcast %cst_29 : f32 to vector<1x2xf32>
      %106 = arith.addf %105, %104 : vector<1x2xf32>
      %cst_30 = arith.constant 1.000000e+00 : f32
      %107 = vector.broadcast %cst_30 : f32 to vector<1x2xf32>
      %108 = arith.divf %107, %106 : vector<1x2xf32>
      %c0_31 = arith.constant 0 : index
      %c0_32 = arith.constant 0 : index
      %109 = vector.load %arg3[%c0_31, %c0_32] : memref<1x2xf32, #tpu.memory_space<vmem>>, vector<1x2xf32>
      tpu.vector_store %arg3[%c0_31, %c0_32], %108 {strides = array<i32>} : memref<1x2xf32, #tpu.memory_space<vmem>>, vector<1x2xf32>,
    } else {
    }
    return
  }
  func.func @transform_0(%arg0: i32) -> (i32, i32, i32) {
    %c0_i32 = arith.constant 0 : i32
    %c0_i32_0 = arith.constant 0 : i32
    %c0_i32_1 = arith.constant 0 : i32
    return %c0_i32, %arg0, %c0_i32_0 : i32, i32, i32
  }
  func.func @transform_1(%arg0: i32) -> i32 {
    %c0_i32 = arith.constant 0 : i32
    %c0_i32_0 = arith.constant 0 : i32
    return %c0_i32 : i32
  }
  func.func @transform_2(%arg0: i32) -> (i32, i32) {
    %c0_i32 = arith.constant 0 : i32
    %c0_i32_0 = arith.constant 0 : i32
    %c0_i32_1 = arith.constant 0 : i32
    return %c0_i32, %c0_i32_0 : i32, i32
  }
}

</mosaic_0001>

<llo_original>
// kernel: tpu_custom_call.1
$region0: #{tpu_custom_call.1}
  #allocation0 [shape = 'u32[]', space=smem, size = 0x4, offset = 0x4, fixed_abs, tag = 'smem constant byte address 0x4 - core index']
  #allocation1 [shape = 'u32[144,128]{1,0:T(1,128)}', space=vmem, size = 0x12000, scoped, tag = 'internal scratch']
  #allocation2 [shape = 'f32[1,2]{1,0:T(1,128)}', space=vmem, size = 0x200, scoped, tag = 'scratch operand']
  #allocation3 [shape = 'f32[8,2]{1,0:T(8,128)}', space=vmem, size = 0x1000, scoped, tag = 'scratch operand']
  %s0 = inlined_call_operand.vmem [shape: f32[2,8,3], index: 0, kind: input, shape index: {}]
  %s1 = inlined_call_operand.vmem [shape: f32[7], index: 1, kind: input, shape index: {}]
  %s2 = inlined_call_operand.hbm [shape: f32[1,2], index: 2, kind: output, shape index: {}]
  %s3 = sld [smem:[#allocation0]]
  $region30: #{tpu_custom_call.1} parent=0
    _
  %s5 = ssub.s32 1, %s3
  %s6 = scalar_select 0, %s5, %s3
  $region1: #{tpu_custom_call.1} parent=0
    #allocation4 [shape = 'u8[512]{0}', space=smem, size = 0x200, scoped, tag = 'input window, operand 1, single buffered']
    #allocation5 [shape = 's32[1]{0}', space=sflag, size = 0x4, scoped, tag = 'scoped memory for tpu_custom_call.1']
    #allocation6 [shape = 's32[1]{0}', space=sflag, size = 0x4, scoped, tag = 'scoped memory for tpu_custom_call.1']
    #allocation7 [shape = 'u8[512]{0}', space=vmem, size = 0x400, scoped, tag = 'output window, operand 0, single buffered']
    %7 = vsyncpa [#allocation6], 0
    %8 = vsyncpa [#allocation5], 0
    // Predicated region
    $region2: #{tpu_custom_call.1} parent=1 // pred_check
      _
    $region3: #{tpu_custom_call.1} parent=1 // pred_check_branch
      %10 = sbr.rel (0) target = $region5
    $region4: #{tpu_custom_call.1} parent=1 // pred_region
      _
    $region5: #{tpu_custom_call.1} parent=1 // pred_fallthru
      _
    // Predicated region
    $region6: #{tpu_custom_call.1} parent=1 // pred_check
      _
    $region7: #{tpu_custom_call.1} parent=1 // pred_check_branch
      %12 = sbr.rel (0) target = $region9
    $region8: #{tpu_custom_call.1} parent=1 // pred_region
      %s14 = ssub.s32 16, 16
      %15 = vsyncadd [#allocation6], %s14
      %s17 = sshll.u32 %s1, 4
      %s18 = int_to_ptr.vmem [resolvable:$true] %s17
      %20 = dma.vmem_to_smem %s18, 16, [#allocation4], [#allocation6]
    $region9: #{tpu_custom_call.1} parent=1 // pred_fallthru
      _
    // Predicated region
    $region10: #{tpu_custom_call.1} parent=1 // pred_check
      _
    $region11: #{tpu_custom_call.1} parent=1 // pred_check_branch
      %22 = sbr.rel (0) target = $region13
    $region12: #{tpu_custom_call.1} parent=1 // pred_region
      %23 = dma.done [#allocation6], 16
    $region13: #{tpu_custom_call.1} parent=1 // pred_fallthru
      _
    %24 = sfence
    %p25 = scmp.eq.s32.totalorder 0, 0
    // Predicated region
    $region14: #{tpu_custom_call.1} parent=1 // pred_check
      %p26 = pneg %p25
    $region15: #{tpu_custom_call.1} parent=1 // pred_check_branch
      %28 = sbr.rel (%p26) target = $region17
    $region16: #{tpu_custom_call.1} parent=1 // pred_region
      %vm29 = vcmask 8192
      %30 = vst.msk [vmem:[#allocation2] sm:$0x1] %vm29, 0.0
    $region17: #{tpu_custom_call.1} parent=1 // pred_fallthru
      _
    %s31 = sld [smem:[#allocation4 + $0x4]]
    %v32 = vld [vmem:[%s0] sm:$0xff]
    %s33 = sld [smem:[#allocation4]]
    %v34 = vstv %s33
    %v35 = vmul.f32 %v32, %v34
    %v36 = vstv %s31
    %v37 = vadd.f32 %v35, %v36
    %s38 = sld [smem:[#allocation4 + $0x1]]
    %v39 = vstv %s38
    %v40 = vmul.f32 %v32, %v39
    %42 = vrot.lane.b32.xlu0 %v40, 127
    %v43 = vpop.permute.xlu0 %42
    %v45 = vadd.f32 %v37, %v43
    %s46 = sld [smem:[#allocation4 + $0x2]]
    %v47 = vstv %s46
    %v48 = vmul.f32 %v32, %v47
    %50 = vrot.lane.b32.xlu0 %v48, 126
    %v51 = vpop.permute.xlu0 %50
    %v53 = vadd.f32 %v45, %v51
    %vm54 = vcmask 7168
    %55 = vst.msk [vmem:[#allocation3] sm:$0xff] %vm54, %v53
    %s56 = scalar_lea.vmem %s0, 8
    %v57 = vld [vmem:[%s56] sm:$0xff]
    %s58 = sld [smem:[#allocation4]]
    %v59 = vstv %s58
    %v60 = vmul.f32 %v57, %v59
    %v61 = vadd.f32 %v60, %v36
    %s62 = sld [smem:[#allocation4 + $0x1]]
    %v63 = vstv %s62
    %v64 = vmul.f32 %v57, %v63
    %66 = vrot.lane.b32.xlu0 %v64, 127
    %v67 = vpop.permute.xlu0 %66
    %v69 = vadd.f32 %v61, %v67
    %s70 = sld [smem:[#allocation4 + $0x2]]
    %v71 = vstv %s70
    %v72 = vmul.f32 %v57, %v71
    %74 = vrot.lane.b32.xlu0 %v72, 126
    %v75 = vpop.permute.xlu0 %74
    %v77 = vadd.f32 %v69, %v75
    %79 = vrot.lane.b32.xlu0 %v77, 1
    %v80 = vpop.permute.xlu0 %79
    %vm82 = vcmask 15368
    %83 = vst.msk [vmem:[#allocation3] sm:$0xff] %vm82, %v80
    %s84 = sld [smem:[#allocation4 + $0x3]]
    %v85 = vld [vmem:[#allocation2] sm:$0x1]
    %v86 = vld [vmem:[#allocation3] sm:$0x1]
    %v87 = vstv %s84
    %v88 = vmul.f32 %v85, %v87
    %v89 = vadd.f32 %v86, %v88
    %v90 = vtanh.pop %v89
    %v91 = vld [vmem:[#allocation3 + $0x1] sm:$0x1]
    %v92 = vmul.f32 %v90, %v87
    %v93 = vadd.f32 %v91, %v92
    %v94 = vtanh.pop %v93
    %v95 = vld [vmem:[#allocation3 + $0x2] sm:$0x1]
    %v96 = vmul.f32 %v94, %v87
    %v97 = vadd.f32 %v95, %v96
    %v98 = vtanh.pop %v97
    %v99 = vld [vmem:[#allocation3 + $0x3] sm:$0x1]
    %v100 = vmul.f32 %v98, %v87
    %v101 = vadd.f32 %v99, %v100
    %v102 = vtanh.pop %v101
    %v103 = vld [vmem:[#allocation3 + $0x4] sm:$0x1]
    %v104 = vmul.f32 %v102, %v87
    %v105 = vadd.f32 %v103, %v104
    %v106 = vtanh.pop %v105
    %v107 = vld [vmem:[#allocation3 + $0x5] sm:$0x1]
    %v108 = vmul.f32 %v106, %v87
    %v109 = vadd.f32 %v107, %v108
    %v110 = vtanh.pop %v109
    %v111 = vld [vmem:[#allocation3 + $0x6] sm:$0x1]
    %v112 = vmul.f32 %v110, %v87
    %v113 = vadd.f32 %v111, %v112
    %v114 = vtanh.pop %v113
    %v115 = vld [vmem:[#allocation3 + $0x7] sm:$0x1]
    %v116 = vmul.f32 %v114, %v87
    %v117 = vadd.f32 %v115, %v116
    %v118 = vtanh.pop %v117
    %vm119 = vcmask 8192
    %120 = vst.msk [vmem:[#allocation2] sm:$0x1] %vm119, %v118
    // Predicated region
    $region18: #{tpu_custom_call.1} parent=1 // pred_check
      %p121 = pneg %p25
    $region19: #{tpu_custom_call.1} parent=1 // pred_check_branch
      %123 = sbr.rel (%p121) target = $region21
    $region20: #{tpu_custom_call.1} parent=1 // pred_region
      %s124 = sld [smem:[#allocation4 + $0x5]]
      %v125 = vstv %s124
      %v126 = vmul.f32 %v118, %v125
      %s127 = sld [smem:[#allocation4 + $0x6]]
      %v128 = vstv %s127
      %v129 = vadd.f32 %v126, %v128
      %v130 = vsub.f32 0.0, %v129
      %v131 = vmul.f32 %v130, 1.442695
      %v132 = vpow.pop %v131
      %v133 = vadd.f32 %v132, 1.0
      %v134 = vrcp.pop %v133
      %v135 = vmul.f32 1.0, %v134
      %136 = vst.msk [vmem:[#allocation7] sm:$0x1] %vm119, %v135
    $region21: #{tpu_custom_call.1} parent=1 // pred_fallthru
      _
    // Predicated region
    $region22: #{tpu_custom_call.1} parent=1 // pred_check
      _
    $region23: #{tpu_custom_call.1} parent=1 // pred_check_branch
      %138 = sbr.rel (0) target = $region25
    $region24: #{tpu_custom_call.1} parent=1 // pred_region
      %s140 = ssub.s32 16, 16
      %141 = vsyncadd [#allocation5], %s140
      %s143 = sshll.u32 [#allocation7], 4
      %s144 = int_to_ptr.vmem [resolvable:$true] %s143
      %146 = dma.vmem_to_hbm [thread:$0]  %s144, 16, %s2, [#allocation5]
    $region25: #{tpu_custom_call.1} parent=1 // pred_fallthru
      _
    // Predicated region
    $region26: #{tpu_custom_call.1} parent=1 // pred_check
      _
    $region27: #{tpu_custom_call.1} parent=1 // pred_check_branch
      %148 = sbr.rel (0) target = $region29
    $region28: #{tpu_custom_call.1} parent=1 // pred_region
      %149 = dma.done [#allocation5], 16
    $region29: #{tpu_custom_call.1} parent=1 // pred_fallthru
      _
    %150 = vsyncpa [#allocation5], 1
    %151 = vsyncpa [#allocation6], 1

</llo_original>
